<compile_context>
chip_gen: v7x
topology: tpu7x:2x2x1
jax: 0.10.0
libtpu: 0.0.40
codegen_flags: <defaults>
</compile_context>

<pallas_src>
import functools

import jax
import jax.numpy as jnp
from jax.experimental import pallas as pl
from jax.experimental.pallas import tpu as pltpu


def _round_up(x, m):
    return ((x + m - 1) // m) * m


def _vmem_budget_bytes():
    """~75% of this generation's physical VMEM (96 MiB v5e/v6e, 48 MiB v7x)."""
    cap = 64 * 1024 * 1024
    try:
        cap = int(getattr(pltpu.get_tpu_info(), "vmem_capacity_bytes", cap))
    except Exception:
        pass
    return max((cap * 3) // 4, 16 * 1024 * 1024)


def _mxu_shape_tile(bt, batch):
    """Clamp a batch tile to the batch and round to MXU-friendly granularity."""
    bt = max(8, min(int(bt), _round_up(batch, 8), 2048))
    for g in (256, 128, 64, 8):
        if bt >= g:
            return (bt // g) * g
    return 8


# ---------------------------------------------------------------------------
# Kernels
# ---------------------------------------------------------------------------

def _highway_kernel(x1_ref, x2_ref, w_ref, b_ref, o_ref, *, matmul_dtype):
    """Full-width path: the whole (f_in, f_out) weight is resident in VMEM."""
    x1 = x1_ref[...]
    x2 = x2_ref[...]
    if matmul_dtype is not None:
        a, wm = x1.astype(matmul_dtype), w_ref[...].astype(matmul_dtype)
    else:
        a, wm = x1, w_ref[...]                 # no upcast: MXU-native operands
    t = jnp.dot(a, wm, preferred_element_type=jnp.float32)
    t = t + b_ref[...].astype(jnp.float32)
    # exp + reciprocal both land in the EUP slot (free-ish vs the VPU combine).
    gate = pl.reciprocal(1.0 + jnp.exp(-t), approx=True)
    # gate*x2 + (1-gate)*x1 == x1 + gate*(x2-x1): one fewer multiply; combine
    # stays in the storage dtype (bf16 VALU on v6e/v7x, halves vreg pressure).
    cdt = x1.dtype
    o_ref[...] = (x1 + gate.astype(cdt) * (x2 - x1)).astype(o_ref.dtype)


def _highway_kernel_ntiled(x1_ref, x2_ref, w_ref, b_ref, o_ref, *, matmul_dtype):
    """Feature-tiled path (large D): W streamed as (f_in, tn) column tiles.

    x1 block is the full feature width (resident across the j axis); the
    matching feature slice is taken in-kernel for the elementwise combine.
    """
    j = pl.program_id(1)
    tn = o_ref.shape[-1]
    x1_full = x1_ref[...]
    if matmul_dtype is not None:
        a, wm = x1_full.astype(matmul_dtype), w_ref[...].astype(matmul_dtype)
    else:
        a, wm = x1_full, w_ref[...]
    t = jnp.dot(a, wm, preferred_element_type=jnp.float32)
    t = t + b_ref[...].astype(jnp.float32)
    gate = pl.reciprocal(1.0 + jnp.exp(-t), approx=True)
    off = pl.multiple_of(j * tn, tn)
    x1 = x1_ref[:, pl.ds(off, tn)]
    x2 = x2_ref[...]
    cdt = x1.dtype
    o_ref[...] = (x1 + gate.astype(cdt) * (x2 - x1)).astype(o_ref.dtype)


# ---------------------------------------------------------------------------
# Wrapper
# ---------------------------------------------------------------------------

def highway_forward(in_1, in_2, w, bias=None, *, batch_tile=None,
                    matmul_dtype=None, interpret=False):
    """Pallas implementation of HighWay.forward."""
    B, f_in = in_1.shape
    f_in_w, f_out = w.shape
    assert f_in == f_in_w, "weight shape mismatch"
    assert in_2.shape == (B, f_out), "in_2 shape mismatch"
    assert f_in == f_out, "highway gate combine requires f_in == f_out"

    out_dtype = in_1.dtype
    if bias is None:
        bias = jnp.zeros((f_out,), dtype=w.dtype)
    bias2d = jnp.asarray(bias).reshape(1, f_out)

    x_item = jnp.dtype(in_1.dtype).itemsize
    w_item = jnp.dtype(w.dtype).itemsize
    item = max(x_item, jnp.dtype(in_2.dtype).itemsize, jnp.dtype(out_dtype).itemsize)

    budget = _vmem_budget_bytes()
    w_bytes = f_in * f_out * w_item            # single-buffered (constant index)

    cost = pl.CostEstimate(
        flops=2 * B * f_in * f_out,
        transcendentals=B * f_out,
        bytes_accessed=(3 * B * f_out + f_in * f_out + f_out) * item,
    )

    def _const_spec(shape, index_map, single_buffer):
        # Constant-index operand: a second pipeline buffer is dead VMEM.
        if single_buffer:
            return pl.BlockSpec(shape, index_map, pipeline_mode=pl.Buffered(1))
        return pl.BlockSpec(shape, index_map)

    # Use the feature-tiled path when the resident weight would eat more than
    # half the scoped-VMEM budget (breaks first on v7x's 64 MiB).
    use_ntiled = (w_bytes > budget // 2) and (f_out % 128 == 0)
    # TODO(synk): large D that is not a multiple of 128 still takes the
    # full-W-resident path and may exceed scoped VMEM.

    if not use_ntiled:
        if batch_tile is None:
            # x1, x2, out each streamed double-buffered; W/bias resident 1x.
            avail = max(budget - w_bytes - 4096, budget // 4)
            batch_tile = _mxu_shape_tile(avail // (6 * f_out * item), B)
        else:
            batch_tile = _mxu_shape_tile(batch_tile, B)

        # For large batches make sure there are >= 2 grid steps so v7x's two
        # TensorCores both get work under dimension_semantics=("parallel",).
        if B >= 512 and -(-B // batch_tile) == 1:
            batch_tile = _mxu_shape_tile(-(-B // 2), B)

        grid = (pl.cdiv(B, batch_tile),)
        kernel = functools.partial(_highway_kernel, matmul_dtype=matmul_dtype)

        def build(single_buffer_w):
            return pl.pallas_call(
                kernel,
                out_shape=jax.ShapeDtypeStruct((B, f_out), out_dtype),
                grid=grid,
                in_specs=[
                    pl.BlockSpec((batch_tile, f_in), lambda i: (i, 0)),
                    pl.BlockSpec((batch_tile, f_out), lambda i: (i, 0)),
                    _const_spec((f_in, f_out), lambda i: (0, 0), single_buffer_w),
                    _const_spec((1, f_out), lambda i: (0, 0), single_buffer_w),
                ],
                out_specs=pl.BlockSpec((batch_tile, f_out), lambda i: (i, 0)),
                compiler_params=pltpu.CompilerParams(
                    dimension_semantics=("parallel",),
                    vmem_limit_bytes=budget,
                ),
                cost_estimate=cost,
                interpret=interpret,
            )
    else:
        # Largest multiple-of-128 divisor of f_out whose double-buffered W
        # column tile stays within ~1/3 of the budget.
        tn = 128
        cand = 128
        while cand <= f_out:
            if f_out % cand == 0 and 2 * f_in * cand * w_item <= budget // 3:
                tn = cand
            cand += 128

        if batch_tile is None:
            per_row = (2 * f_in + 4 * tn) * item   # x1(2x) + x2(2x) + out(2x)
            avail = max(budget - 2 * f_in * tn * w_item - 4096, budget // 4)
            batch_tile = _mxu_shape_tile(avail // per_row, B)
        else:
            batch_tile = _mxu_shape_tile(batch_tile, B)

        grid = (pl.cdiv(B, batch_tile), f_out // tn)
        kernel = functools.partial(_highway_kernel_ntiled, matmul_dtype=matmul_dtype)

        def build(single_buffer_w):
            del single_buffer_w  # W index varies with j here; keep 2 buffers.
            return pl.pallas_call(
                kernel,
                out_shape=jax.ShapeDtypeStruct((B, f_out), out_dtype),
                grid=grid,
                in_specs=[
                    pl.BlockSpec((batch_tile, f_in), lambda i, j: (i, 0)),
                    pl.BlockSpec((batch_tile, tn), lambda i, j: (i, j)),
                    pl.BlockSpec((f_in, tn), lambda i, j: (0, j)),
                    pl.BlockSpec((1, tn), lambda i, j: (0, j)),
                ],
                out_specs=pl.BlockSpec((batch_tile, tn), lambda i, j: (i, j)),
                compiler_params=pltpu.CompilerParams(
                    dimension_semantics=("parallel", "arbitrary"),
                    vmem_limit_bytes=budget,
                ),
                cost_estimate=cost,
                interpret=interpret,
            )

    try:
        return build(True)(in_1, in_2, w, bias2d)
    except Exception:
        # Fallback if this JAX build rejects single-buffering via pl.Buffered(1).
        return build(False)(in_1, in_2, w, bias2d)


def _reference(in_1, in_2, w, bias):
    """Pure-JAX f32 reference mirroring the PyTorch forward."""
    t = in_1.astype(jnp.float32) @ w.astype(jnp.float32)
    if bias is not None:
        t = t + bias.astype(jnp.float32)
    gate = jax.nn.sigmoid(t)
    return gate * in_2.astype(jnp.float32) + (1.0 - gate) * in_1.astype(jnp.float32)


if __name__ == "__main__":
    key = jax.random.PRNGKey(0)
    kw, k1, k2 = jax.random.split(key, 3)

    B, D = 16, 32  # small shapes: batch=16, hidden=32 (f_in == f_out)
    # Xavier-uniform weight init, zero bias — matches the PyTorch module's init.
    limit = float(jnp.sqrt(6.0 / (D + D)))
    w = jax.random.uniform(kw, (D, D), jnp.float32, -limit, limit)
    bias = jnp.zeros((D,), jnp.float32)
    in_1 = jax.random.normal(k1, (B, D), dtype=jnp.float32)
    in_2 = jax.random.normal(k2, (B, D), dtype=jnp.float32)

    # f32 storage path (default auto-sized batch tile, single grid step).
    out = highway_forward(in_1, in_2, w, bias)
    out = jax.block_until_ready(out)
    ref = _reference(in_1, in_2, w, bias)
    assert out.shape == (B, D)
    assert jnp.allclose(out.astype(jnp.float32), ref, atol=1e-2, rtol=1e-2)

    # bf16 storage path: operands hit the MXU un-upcast, combine stays in bf16.
    out_bf = highway_forward(in_1.astype(jnp.bfloat16), in_2.astype(jnp.bfloat16),
                             w.astype(jnp.bfloat16), bias.astype(jnp.bfloat16))
    out_bf = jax.block_until_ready(out_bf)
    ref_bf = _reference(in_1.astype(jnp.bfloat16), in_2.astype(jnp.bfloat16),
                        w.astype(jnp.bfloat16), bias.astype(jnp.bfloat16))
    assert jnp.allclose(out_bf.astype(jnp.float32), ref_bf, atol=5e-2, rtol=5e-2)

    print("KERNEL_OK")
</pallas_src>

<mosaic_0001>
module attributes {stable_mosaic.version = 11 : i64} {
  func.func @_highway_kernel(%arg0: i32, %arg1: memref<16x32xf32, #tpu.memory_space<vmem>>, %arg2: memref<16x32xf32, #tpu.memory_space<vmem>>, %arg3: memref<32x32xf32, #tpu.memory_space<vmem>>, %arg4: memref<1x32xf32, #tpu.memory_space<vmem>>, %arg5: memref<16x32xf32, #tpu.memory_space<vmem>>) attributes {dimension_semantics = [#tpu.dimension_semantics<parallel>], iteration_bounds = array<i64: 1>, scalar_prefetch = 0 : i64, scratch_operands = 0 : i64, tpu.core_type = #tpu.core_type<tc>, window_params = [{transform_indices = @transform_0, window_bounds = array<i64: 16, 32>}, {transform_indices = @transform_1, window_bounds = array<i64: 16, 32>}, {pipeline_mode = #tpu.pipeline_mode<synchronous>, transform_indices = @transform_2, window_bounds = array<i64: 32, 32>}, {pipeline_mode = #tpu.pipeline_mode<synchronous>, transform_indices = @transform_3, window_bounds = array<i64: 1, 32>}, {transform_indices = @transform_4, window_bounds = array<i64: 16, 32>}]} {
    %c0 = arith.constant 0 : index
    %c0_0 = arith.constant 0 : index
    %0 = vector.load %arg1[%c0, %c0_0] : memref<16x32xf32, #tpu.memory_space<vmem>>, vector<16x32xf32>
    %c0_1 = arith.constant 0 : index
    %c0_2 = arith.constant 0 : index
    %1 = vector.load %arg2[%c0_1, %c0_2] : memref<16x32xf32, #tpu.memory_space<vmem>>, vector<16x32xf32>
    %c0_3 = arith.constant 0 : index
    %c0_4 = arith.constant 0 : index
    %2 = vector.load %arg3[%c0_3, %c0_4] : memref<32x32xf32, #tpu.memory_space<vmem>>, vector<32x32xf32>
    %cst = arith.constant dense<0.000000e+00> : vector<16x32xf32>
    %3 = tpu.matmul %0, %2, %cst {dimension_numbers = #tpu.dot_dimension_numbers<[1], [0], [0], [1], [0, 0, 1, 1], [], []>} : vector<16x32xf32>, vector<32x32xf32>, vector<16x32xf32> -> vector<16x32xf32>
    %c0_5 = arith.constant 0 : index
    %c0_6 = arith.constant 0 : index
    %4 = vector.load %arg4[%c0_5, %c0_6] : memref<1x32xf32, #tpu.memory_space<vmem>>, vector<1x32xf32>
    %5 = vector.broadcast %4 : vector<1x32xf32> to vector<16x32xf32>
    %6 = arith.addf %3, %5 : vector<16x32xf32>
    %cst_7 = arith.constant 0.000000e+00 : f32
    %7 = vector.broadcast %cst_7 : f32 to vector<16x32xf32>
    %8 = arith.subf %7, %6 : vector<16x32xf32>
    %9 = math.exp %8 : vector<16x32xf32>
    %cst_8 = arith.constant 1.000000e+00 : f32
    %10 = vector.broadcast %cst_8 : f32 to vector<16x32xf32>
    %11 = arith.addf %10, %9 : vector<16x32xf32>
    %12 = tpu.reciprocal %11 {approx = true} : vector<16x32xf32> -> vector<16x32xf32>
    %13 = arith.subf %1, %0 : vector<16x32xf32>
    %14 = arith.mulf %12, %13 : vector<16x32xf32>
    %15 = arith.addf %0, %14 : vector<16x32xf32>
    %c0_9 = arith.constant 0 : index
    %c0_10 = arith.constant 0 : index
    %16 = vector.load %arg5[%c0_9, %c0_10] : memref<16x32xf32, #tpu.memory_space<vmem>>, vector<16x32xf32>
    tpu.vector_store %arg5[%c0_9, %c0_10], %15 {strides = array<i32>} : memref<16x32xf32, #tpu.memory_space<vmem>>, vector<16x32xf32>,
    return
  }
  func.func @transform_0(%arg0: i32) -> (i32, i32) {
    %c0_i32 = arith.constant 0 : i32
    %c0_i32_0 = arith.constant 0 : i32
    return %arg0, %c0_i32 : i32, i32
  }
  func.func @transform_1(%arg0: i32) -> (i32, i32) {
    %c0_i32 = arith.constant 0 : i32
    %c0_i32_0 = arith.constant 0 : i32
    return %arg0, %c0_i32 : i32, i32
  }
  func.func @transform_2(%arg0: i32) -> (i32, i32) {
    %c0_i32 = arith.constant 0 : i32
    %c0_i32_0 = arith.constant 0 : i32
    %c0_i32_1 = arith.constant 0 : i32
    return %c0_i32, %c0_i32_0 : i32, i32
  }
  func.func @transform_3(%arg0: i32) -> (i32, i32) {
    %c0_i32 = arith.constant 0 : i32
    %c0_i32_0 = arith.constant 0 : i32
    %c0_i32_1 = arith.constant 0 : i32
    return %c0_i32, %c0_i32_0 : i32, i32
  }
  func.func @transform_4(%arg0: i32) -> (i32, i32) {
    %c0_i32 = arith.constant 0 : i32
    %c0_i32_0 = arith.constant 0 : i32
    return %arg0, %c0_i32 : i32, i32
  }
}

module attributes {stable_mosaic.version = 11 : i64} {
  func.func @_highway_kernel(%arg0: i32, %arg1: memref<16x32xf32, #tpu.memory_space<vmem>>, %arg2: memref<16x32xf32, #tpu.memory_space<vmem>>, %arg3: memref<32x32xf32, #tpu.memory_space<vmem>>, %arg4: memref<1x32xf32, #tpu.memory_space<vmem>>, %arg5: memref<16x32xf32, #tpu.memory_space<vmem>>) attributes {dimension_semantics = [#tpu.dimension_semantics<parallel>], iteration_bounds = array<i64: 1>, scalar_prefetch = 0 : i64, scratch_operands = 0 : i64, tpu.core_type = #tpu.core_type<tc>, window_params = [{transform_indices = @transform_0, window_bounds = array<i64: 16, 32>}, {transform_indices = @transform_1, window_bounds = array<i64: 16, 32>}, {pipeline_mode = #tpu.pipeline_mode<synchronous>, transform_indices = @transform_2, window_bounds = array<i64: 32, 32>}, {pipeline_mode = #tpu.pipeline_mode<synchronous>, transform_indices = @transform_3, window_bounds = array<i64: 1, 32>}, {transform_indices = @transform_4, window_bounds = array<i64: 16, 32>}]} {
    %c0 = arith.constant 0 : index
    %c0_0 = arith.constant 0 : index
    %0 = vector.load %arg1[%c0, %c0_0] : memref<16x32xf32, #tpu.memory_space<vmem>>, vector<16x32xf32>
    %c0_1 = arith.constant 0 : index
    %c0_2 = arith.constant 0 : index
    %1 = vector.load %arg2[%c0_1, %c0_2] : memref<16x32xf32, #tpu.memory_space<vmem>>, vector<16x32xf32>
    %c0_3 = arith.constant 0 : index
    %c0_4 = arith.constant 0 : index
    %2 = vector.load %arg3[%c0_3, %c0_4] : memref<32x32xf32, #tpu.memory_space<vmem>>, vector<32x32xf32>
    %cst = arith.constant dense<0.000000e+00> : vector<16x32xf32>
    %3 = tpu.matmul %0, %2, %cst {dimension_numbers = #tpu.dot_dimension_numbers<[1], [0], [0], [1], [0, 0, 1, 1], [], []>} : vector<16x32xf32>, vector<32x32xf32>, vector<16x32xf32> -> vector<16x32xf32>
    %c0_5 = arith.constant 0 : index
    %c0_6 = arith.constant 0 : index
    %4 = vector.load %arg4[%c0_5, %c0_6] : memref<1x32xf32, #tpu.memory_space<vmem>>, vector<1x32xf32>
    %5 = vector.broadcast %4 : vector<1x32xf32> to vector<16x32xf32>
    %6 = arith.addf %3, %5 : vector<16x32xf32>
    %cst_7 = arith.constant 0.000000e+00 : f32
    %7 = vector.broadcast %cst_7 : f32 to vector<16x32xf32>
    %8 = arith.subf %7, %6 : vector<16x32xf32>
    %9 = math.exp %8 : vector<16x32xf32>
    %cst_8 = arith.constant 1.000000e+00 : f32
    %10 = vector.broadcast %cst_8 : f32 to vector<16x32xf32>
    %11 = arith.addf %10, %9 : vector<16x32xf32>
    %12 = tpu.reciprocal %11 {approx = true} : vector<16x32xf32> -> vector<16x32xf32>
    %13 = arith.subf %1, %0 : vector<16x32xf32>
    %14 = arith.mulf %12, %13 : vector<16x32xf32>
    %15 = arith.addf %0, %14 : vector<16x32xf32>
    %c0_9 = arith.constant 0 : index
    %c0_10 = arith.constant 0 : index
    %16 = vector.load %arg5[%c0_9, %c0_10] : memref<16x32xf32, #tpu.memory_space<vmem>>, vector<16x32xf32>
    tpu.vector_store %arg5[%c0_9, %c0_10], %15 {strides = array<i32>} : memref<16x32xf32, #tpu.memory_space<vmem>>, vector<16x32xf32>,
    return
  }
  func.func @transform_0(%arg0: i32) -> (i32, i32) {
    %c0_i32 = arith.constant 0 : i32
    %c0_i32_0 = arith.constant 0 : i32
    return %arg0, %c0_i32 : i32, i32
  }
  func.func @transform_1(%arg0: i32) -> (i32, i32) {
    %c0_i32 = arith.constant 0 : i32
    %c0_i32_0 = arith.constant 0 : i32
    return %arg0, %c0_i32 : i32, i32
  }
  func.func @transform_2(%arg0: i32) -> (i32, i32) {
    %c0_i32 = arith.constant 0 : i32
    %c0_i32_0 = arith.constant 0 : i32
    %c0_i32_1 = arith.constant 0 : i32
    return %c0_i32, %c0_i32_0 : i32, i32
  }
  func.func @transform_3(%arg0: i32) -> (i32, i32) {
    %c0_i32 = arith.constant 0 : i32
    %c0_i32_0 = arith.constant 0 : i32
    %c0_i32_1 = arith.constant 0 : i32
    return %c0_i32, %c0_i32_0 : i32, i32
  }
  func.func @transform_4(%arg0: i32) -> (i32, i32) {
    %c0_i32 = arith.constant 0 : i32
    %c0_i32_0 = arith.constant 0 : i32
    return %arg0, %c0_i32 : i32, i32
  }
}

</mosaic_0001>

<llo_original>
// kernel: tpu_custom_call.1
$region0: #{tpu_custom_call.1}
  #allocation0 [shape = 'u32[]', space=smem, size = 0x4, offset = 0x4, fixed_abs, tag = 'smem constant byte address 0x4 - core index']
  #allocation1 [shape = 'u32[144,128]{1,0:T(1,128)}', space=vmem, size = 0x12000, scoped, tag = 'internal scratch']
  %s0 = inlined_call_operand.hbm [shape: f32[16,32], index: 0, kind: input, shape index: {}]
  %s1 = inlined_call_operand.hbm [shape: f32[16,32], index: 1, kind: input, shape index: {}]
  %s2 = inlined_call_operand.hbm [shape: f32[32,32], index: 2, kind: input, shape index: {}]
  %s3 = inlined_call_operand.vmem [shape: f32[1,32], index: 3, kind: input, shape index: {}]
  %s4 = inlined_call_operand.hbm [shape: f32[16,32], index: 4, kind: output, shape index: {}]
  %s5 = sld [smem:[#allocation0]]
  $region38: #{tpu_custom_call.1} parent=0
    _
  %s7 = ssub.s32 1, %s5
  %s8 = scalar_select 0, %s7, %s5
  $region1: #{tpu_custom_call.1} parent=0
    #allocation2 [shape = 'u8[8192]{0}', space=vmem, size = 0x2000, scoped, tag = 'input window, operand 0, single buffered']
    #allocation3 [shape = 's32[1]{0}', space=sflag, size = 0x4, scoped, tag = 'scoped memory for tpu_custom_call.1']
    #allocation4 [shape = 's32[1]{0}', space=sflag, size = 0x4, scoped, tag = 'scoped memory for tpu_custom_call.1']
    #allocation5 [shape = 'u8[8192]{0}', space=vmem, size = 0x2000, scoped, tag = 'input window, operand 1, single buffered']
    #allocation6 [shape = 's32[1]{0}', space=sflag, size = 0x4, scoped, tag = 'scoped memory for tpu_custom_call.1']
    #allocation7 [shape = 'u8[16384]{0}', space=vmem, size = 0x4000, scoped, tag = 'input window, operand 2, single buffered']
    #allocation8 [shape = 'u8[8192]{0}', space=vmem, size = 0x2000, scoped, tag = 'output window, operand 0, single buffered']
    %9 = vsyncpa [#allocation3], 0
    %10 = vsyncpa [#allocation6], 0
    %11 = vsyncpa [#allocation4], 0
    // Predicated region
    $region2: #{tpu_custom_call.1} parent=1 // pred_check
      _
    $region3: #{tpu_custom_call.1} parent=1 // pred_check_branch
      %13 = sbr.rel (0) target = $region5
    $region4: #{tpu_custom_call.1} parent=1 // pred_region
      %s15 = ssub.s32 256, 256
      %16 = vsyncadd [#allocation3], %s15
      %s17 = sshll.u32 [#allocation2], 4
      %s18 = int_to_ptr.vmem [resolvable:$true] %s17
      %23 = dma.hbm_to_vmem [thread:$0]  %s0, 256, %s18, [#allocation3], 128, 128, 8
    $region5: #{tpu_custom_call.1} parent=1 // pred_fallthru
      _
    // Predicated region
    $region6: #{tpu_custom_call.1} parent=1 // pred_check
      _
    $region7: #{tpu_custom_call.1} parent=1 // pred_check_branch
      %25 = sbr.rel (0) target = $region9
    $region8: #{tpu_custom_call.1} parent=1 // pred_region
      %s27 = ssub.s32 256, 256
      %28 = vsyncadd [#allocation6], %s27
      %s29 = sshll.u32 [#allocation5], 4
      %s30 = int_to_ptr.vmem [resolvable:$true] %s29
      %35 = dma.hbm_to_vmem [thread:$0]  %s1, 256, %s30, [#allocation6], 128, 128, 8
    $region9: #{tpu_custom_call.1} parent=1 // pred_fallthru
      _
    // Predicated region
    $region10: #{tpu_custom_call.1} parent=1 // pred_check
      _
    $region11: #{tpu_custom_call.1} parent=1 // pred_check_branch
      %37 = sbr.rel (0) target = $region13
    $region12: #{tpu_custom_call.1} parent=1 // pred_region
      %s39 = ssub.s32 512, 512
      %40 = vsyncadd [#allocation6], %s39
      %s41 = sshll.u32 [#allocation7], 4
      %s42 = int_to_ptr.vmem [resolvable:$true] %s41
      %47 = dma.hbm_to_vmem [thread:$0]  %s2, 512, %s42, [#allocation6], 128, 128, 8
    $region13: #{tpu_custom_call.1} parent=1 // pred_fallthru
      _
    // Predicated region
    $region14: #{tpu_custom_call.1} parent=1 // pred_check
      _
    $region15: #{tpu_custom_call.1} parent=1 // pred_check_branch
      %49 = sbr.rel (0) target = $region17
    $region16: #{tpu_custom_call.1} parent=1 // pred_region
      _
    $region17: #{tpu_custom_call.1} parent=1 // pred_fallthru
      _
    // Predicated region
    $region18: #{tpu_custom_call.1} parent=1 // pred_check
      _
    $region19: #{tpu_custom_call.1} parent=1 // pred_check_branch
      %51 = sbr.rel (0) target = $region21
    $region20: #{tpu_custom_call.1} parent=1 // pred_region
      %52 = dma.done [#allocation3], 256
    $region21: #{tpu_custom_call.1} parent=1 // pred_fallthru
      _
    // Predicated region
    $region22: #{tpu_custom_call.1} parent=1 // pred_check
      _
    $region23: #{tpu_custom_call.1} parent=1 // pred_check_branch
      %54 = sbr.rel (0) target = $region25
    $region24: #{tpu_custom_call.1} parent=1 // pred_region
      %55 = dma.done [#allocation6], 256
    $region25: #{tpu_custom_call.1} parent=1 // pred_fallthru
      _
    // Predicated region
    $region26: #{tpu_custom_call.1} parent=1 // pred_check
      _
    $region27: #{tpu_custom_call.1} parent=1 // pred_check_branch
      %57 = sbr.rel (0) target = $region29
    $region28: #{tpu_custom_call.1} parent=1 // pred_region
      %58 = dma.done [#allocation6], 512
    $region29: #{tpu_custom_call.1} parent=1 // pred_fallthru
      _
    %v59 = vld [vmem:[#allocation2] sm:$0xff]
    %v60 = vld [vmem:[#allocation2 + $0x8] sm:$0xff]
    %v61 = vld [vmem:[#allocation5] sm:$0xff]
    %v62 = vld [vmem:[#allocation5 + $0x8] sm:$0xff]
    %v63 = vld [vmem:[#allocation7] sm:$0xff]
    %v64 = vld [vmem:[#allocation7 + $0x8] sm:$0xff]
    %v65 = vld [vmem:[#allocation7 + $0x10] sm:$0xff]
    %v66 = vld [vmem:[#allocation7 + $0x18] sm:$0xff]
    %v67 = vld [vmem:[%s3] sm:$0x1]
    %v69 = vlaneseq
    %v70 = vshrl.u32 %v69, 7
    %v71 = vsub.s32 0, %v70
    %v72 = vrot.slane %v67, %v71
    %vm74 = vcmask 261120
    %v76 = vsel %vm74, %v59, 0
    %v79 = vsel %vm74, %v60, 0
    %81 = vmatprep.subr.mxu0 0.0
    %82 = vmatpush1.msra.mxu0 %v63
    %83 = vmatprep.subr.mxu0 0.0
    %84 = vmatpush1.msra.mxu0 %v64
    %85 = vmatprep.subr.mxu0 0.0
    %86 = vmatpush1.msra.mxu0 %v65
    %87 = vmatprep.subr.mxu0 0.0
    %88 = vmatpush1.msra.mxu0 %v66
    %89 = vmatprep.subr.mxu0 0.0
    %90 = vmatpush1.msra.mxu0 0.0
    %91 = vmatprep.subr.mxu0 0.0
    %92 = vmatpush1.msra.mxu0 0.0
    %93 = vmatprep.subr.mxu0 0.0
    %94 = vmatpush1.msra.mxu0 0.0
    %95 = vmatprep.subr.mxu0 0.0
    %96 = vmatpush1.msra.mxu0 0.0
    %97 = vmatprep.subr.mxu0 0.0
    %98 = vmatpush1.msra.mxu0 0.0
    %99 = vmatprep.subr.mxu0 0.0
    %100 = vmatpush1.msra.mxu0 0.0
    %101 = vmatprep.subr.mxu0 0.0
    %102 = vmatpush1.msra.mxu0 0.0
    %103 = vmatprep.subr.mxu0 0.0
    %104 = vmatpush1.msra.mxu0 0.0
    %105 = vmatprep.subr.mxu0 0.0
    %106 = vmatpush1.msra.mxu0 0.0
    %107 = vmatprep.subr.mxu0 0.0
    %108 = vmatpush1.msra.mxu0 0.0
    %109 = vmatprep.subr.mxu0 0.0
    %110 = vmatpush1.msra.mxu0 0.0
    %111 = vmatprep.subr.mxu0 0.0
    %112 = vmatpush1.msra.mxu0 0.0
    %113 = vmatprep.subr.mxu0 0.0
    %114 = vmatpush1.msra.mxu0 0.0
    %115 = vmatprep.subr.mxu0 0.0
    %116 = vmatpush1.msra.mxu0 0.0
    %117 = vmatprep.subr.mxu0 0.0
    %118 = vmatpush1.msra.mxu0 0.0
    %119 = vmatprep.subr.mxu0 0.0
    %120 = vmatpush1.msra.mxu0 0.0
    %121 = vmatprep.subr.mxu0 0.0
    %122 = vmatpush1.msra.mxu0 0.0
    %123 = vmatprep.subr.mxu0 0.0
    %124 = vmatpush1.msra.mxu0 0.0
    %125 = vmatprep.subr.mxu0 0.0
    %126 = vmatpush1.msra.mxu0 0.0
    %127 = vmatprep.subr.mxu0 0.0
    %128 = vmatpush1.msra.mxu0 0.0
    %129 = vmatprep.subr.mxu0 0.0
    %130 = vmatpush1.msra.mxu0 0.0
    %131 = vmatprep.subr.mxu0 0.0
    %132 = vmatpush1.msra.mxu0 0.0
    %133 = vmatprep.subr.mxu0 0.0
    %134 = vmatpush1.msra.mxu0 0.0
    %135 = vmatprep.subr.mxu0 0.0
    %136 = vmatpush1.msra.mxu0 0.0
    %137 = vmatprep.subr.mxu0 0.0
    %138 = vmatpush1.msra.mxu0 0.0
    %139 = vmatprep.subr.mxu0 0.0
    %140 = vmatpush1.msra.mxu0 0.0
    %141 = vmatprep.subr.mxu0 0.0
    %142 = vmatpush1.msra.mxu0 0.0
    %143 = vmatprep.subr.mxu0 0.0
    %144 = vmatpush1.msra.mxu0 0.0
    %145 = vmatprep.mubr.f32.mxu0 0.0
    %146 = vmatmul.mubr.f32.gmra.mrb[0].mxu0 %v76
    %v147 = vpop.f32.mrb[0].mxu0
    %v148 = vadd.f32 %v72, %v147
    %v149 = vpop.f32.mrb[0].mxu0
    %150 = vmatprep.mubr.f32.mxu0 0.0
    %151 = vmatmul.mubr.f32.gmra.mrb[0].mxu0 %v79
    %v152 = vpop.f32.mrb[0].mxu0
    %v153 = vadd.f32 %v72, %v152
    %v154 = vpop.f32.mrb[0].mxu0
    %155 = vdwg.mxu0
    %v156 = vsub.f32 0.0, %v148
    %v157 = vsub.f32 0.0, %v153
    %v158 = vmul.f32 %v156, 1.442695
    %v159 = vpow.pop %v158
    %v160 = vmul.f32 %v157, 1.442695
    %v161 = vpow.pop %v160
    %v162 = vadd.f32 %v159, 1.0
    %v163 = vadd.f32 %v161, 1.0
    %v164 = vrcp.pop %v162
    %v165 = vrcp.pop %v163
    %v166 = vsub.f32 %v61, %v59
    %v167 = vsub.f32 %v62, %v60
    %v168 = vmul.f32 %v164, %v166
    %v169 = vmul.f32 %v165, %v167
    %v170 = vadd.f32 %v59, %v168
    %v171 = vadd.f32 %v60, %v169
    %172 = vst.msk [vmem:[#allocation8] sm:$0xff] %vm74, %v170
    %173 = vst.msk [vmem:[#allocation8 + $0x8] sm:$0xff] %vm74, %v171
    // Predicated region
    $region30: #{tpu_custom_call.1} parent=1 // pred_check
      _
    $region31: #{tpu_custom_call.1} parent=1 // pred_check_branch
      %175 = sbr.rel (0) target = $region33
    $region32: #{tpu_custom_call.1} parent=1 // pred_region
      %s177 = ssub.s32 256, 256
      %178 = vsyncadd [#allocation4], %s177
      %s179 = sshll.u32 [#allocation8], 4
      %s180 = int_to_ptr.vmem [resolvable:$true] %s179
      %185 = dma.vmem_to_hbm [thread:$0]  %s180, 256, %s4, [#allocation4], 128, 128, 8
    $region33: #{tpu_custom_call.1} parent=1 // pred_fallthru
      _
    // Predicated region
    $region34: #{tpu_custom_call.1} parent=1 // pred_check
      _
    $region35: #{tpu_custom_call.1} parent=1 // pred_check_branch
      %187 = sbr.rel (0) target = $region37
    $region36: #{tpu_custom_call.1} parent=1 // pred_region
      %188 = dma.done [#allocation4], 256
    $region37: #{tpu_custom_call.1} parent=1 // pred_fallthru
      _
    %189 = vsyncpa [#allocation3], 1
    %190 = vsyncpa [#allocation6], 1
    %191 = vsyncpa [#allocation4], 1

// kernel: tpu_custom_call.1
$region0: #{tpu_custom_call.1}
  #allocation0 [shape = 'u32[]', space=smem, size = 0x4, offset = 0x4, fixed_abs, tag = 'smem constant byte address 0x4 - core index']
  #allocation1 [shape = 'u32[144,128]{1,0:T(1,128)}', space=vmem, size = 0x12000, scoped, tag = 'internal scratch']
  %s0 = inlined_call_operand.hbm [shape: f32[16,32], index: 0, kind: input, shape index: {}]
  %s1 = inlined_call_operand.hbm [shape: f32[16,32], index: 1, kind: input, shape index: {}]
  %s2 = inlined_call_operand.hbm [shape: f32[32,32], index: 2, kind: input, shape index: {}]
  %s3 = inlined_call_operand.vmem [shape: f32[1,32], index: 3, kind: input, shape index: {}]
  %s4 = inlined_call_operand.hbm [shape: f32[16,32], index: 4, kind: output, shape index: {}]
  %s5 = sld [smem:[#allocation0]]
  $region38: #{tpu_custom_call.1} parent=0
    _
  %s7 = ssub.s32 1, %s5
  %s8 = scalar_select 0, %s7, %s5
  $region1: #{tpu_custom_call.1} parent=0
    #allocation2 [shape = 'u8[8192]{0}', space=vmem, size = 0x2000, scoped, tag = 'input window, operand 0, single buffered']
    #allocation3 [shape = 's32[1]{0}', space=sflag, size = 0x4, scoped, tag = 'scoped memory for tpu_custom_call.1']
    #allocation4 [shape = 's32[1]{0}', space=sflag, size = 0x4, scoped, tag = 'scoped memory for tpu_custom_call.1']
    #allocation5 [shape = 'u8[8192]{0}', space=vmem, size = 0x2000, scoped, tag = 'input window, operand 1, single buffered']
    #allocation6 [shape = 's32[1]{0}', space=sflag, size = 0x4, scoped, tag = 'scoped memory for tpu_custom_call.1']
    #allocation7 [shape = 'u8[16384]{0}', space=vmem, size = 0x4000, scoped, tag = 'input window, operand 2, single buffered']
    #allocation8 [shape = 'u8[8192]{0}', space=vmem, size = 0x2000, scoped, tag = 'output window, operand 0, single buffered']
    %9 = vsyncpa [#allocation3], 0
    %10 = vsyncpa [#allocation6], 0
    %11 = vsyncpa [#allocation4], 0
    // Predicated region
    $region2: #{tpu_custom_call.1} parent=1 // pred_check
      _
    $region3: #{tpu_custom_call.1} parent=1 // pred_check_branch
      %13 = sbr.rel (0) target = $region5
    $region4: #{tpu_custom_call.1} parent=1 // pred_region
      %s15 = ssub.s32 256, 256
      %16 = vsyncadd [#allocation3], %s15
      %s17 = sshll.u32 [#allocation2], 4
      %s18 = int_to_ptr.vmem [resolvable:$true] %s17
      %23 = dma.hbm_to_vmem [thread:$0]  %s0, 256, %s18, [#allocation3], 128, 128, 8
    $region5: #{tpu_custom_call.1} parent=1 // pred_fallthru
      _
    // Predicated region
    $region6: #{tpu_custom_call.1} parent=1 // pred_check
      _
    $region7: #{tpu_custom_call.1} parent=1 // pred_check_branch
      %25 = sbr.rel (0) target = $region9
    $region8: #{tpu_custom_call.1} parent=1 // pred_region
      %s27 = ssub.s32 256, 256
      %28 = vsyncadd [#allocation6], %s27
      %s29 = sshll.u32 [#allocation5], 4
      %s30 = int_to_ptr.vmem [resolvable:$true] %s29
      %35 = dma.hbm_to_vmem [thread:$0]  %s1, 256, %s30, [#allocation6], 128, 128, 8
    $region9: #{tpu_custom_call.1} parent=1 // pred_fallthru
      _
    // Predicated region
    $region10: #{tpu_custom_call.1} parent=1 // pred_check
      _
    $region11: #{tpu_custom_call.1} parent=1 // pred_check_branch
      %37 = sbr.rel (0) target = $region13
    $region12: #{tpu_custom_call.1} parent=1 // pred_region
      %s39 = ssub.s32 512, 512
      %40 = vsyncadd [#allocation6], %s39
      %s41 = sshll.u32 [#allocation7], 4
      %s42 = int_to_ptr.vmem [resolvable:$true] %s41
      %47 = dma.hbm_to_vmem [thread:$0]  %s2, 512, %s42, [#allocation6], 128, 128, 8
    $region13: #{tpu_custom_call.1} parent=1 // pred_fallthru
      _
    // Predicated region
    $region14: #{tpu_custom_call.1} parent=1 // pred_check
      _
    $region15: #{tpu_custom_call.1} parent=1 // pred_check_branch
      %49 = sbr.rel (0) target = $region17
    $region16: #{tpu_custom_call.1} parent=1 // pred_region
      _
    $region17: #{tpu_custom_call.1} parent=1 // pred_fallthru
      _
    // Predicated region
    $region18: #{tpu_custom_call.1} parent=1 // pred_check
      _
    $region19: #{tpu_custom_call.1} parent=1 // pred_check_branch
      %51 = sbr.rel (0) target = $region21
    $region20: #{tpu_custom_call.1} parent=1 // pred_region
      %52 = dma.done [#allocation3], 256
    $region21: #{tpu_custom_call.1} parent=1 // pred_fallthru
      _
    // Predicated region
    $region22: #{tpu_custom_call.1} parent=1 // pred_check
      _
    $region23: #{tpu_custom_call.1} parent=1 // pred_check_branch
      %54 = sbr.rel (0) target = $region25
    $region24: #{tpu_custom_call.1} parent=1 // pred_region
      %55 = dma.done [#allocation6], 256
    $region25: #{tpu_custom_call.1} parent=1 // pred_fallthru
      _
    // Predicated region
    $region26: #{tpu_custom_call.1} parent=1 // pred_check
      _
    $region27: #{tpu_custom_call.1} parent=1 // pred_check_branch
      %57 = sbr.rel (0) target = $region29
    $region28: #{tpu_custom_call.1} parent=1 // pred_region
      %58 = dma.done [#allocation6], 512
    $region29: #{tpu_custom_call.1} parent=1 // pred_fallthru
      _
    %v59 = vld [vmem:[#allocation2] sm:$0xff]
    %v60 = vld [vmem:[#allocation2 + $0x8] sm:$0xff]
    %v61 = vld [vmem:[#allocation5] sm:$0xff]
    %v62 = vld [vmem:[#allocation5 + $0x8] sm:$0xff]
    %v63 = vld [vmem:[#allocation7] sm:$0xff]
    %v64 = vld [vmem:[#allocation7 + $0x8] sm:$0xff]
    %v65 = vld [vmem:[#allocation7 + $0x10] sm:$0xff]
    %v66 = vld [vmem:[#allocation7 + $0x18] sm:$0xff]
    %v67 = vld [vmem:[%s3] sm:$0x1]
    %v69 = vlaneseq
    %v70 = vshrl.u32 %v69, 7
    %v71 = vsub.s32 0, %v70
    %v72 = vrot.slane %v67, %v71
    %vm74 = vcmask 261120
    %v76 = vsel %vm74, %v59, 0
    %v79 = vsel %vm74, %v60, 0
    %81 = vmatprep.subr.mxu0 0.0
    %82 = vmatpush1.msra.mxu0 %v63
    %83 = vmatprep.subr.mxu0 0.0
    %84 = vmatpush1.msra.mxu0 %v64
    %85 = vmatprep.subr.mxu0 0.0
    %86 = vmatpush1.msra.mxu0 %v65
    %87 = vmatprep.subr.mxu0 0.0
    %88 = vmatpush1.msra.mxu0 %v66
    %89 = vmatprep.subr.mxu0 0.0
    %90 = vmatpush1.msra.mxu0 0.0
    %91 = vmatprep.subr.mxu0 0.0
    %92 = vmatpush1.msra.mxu0 0.0
    %93 = vmatprep.subr.mxu0 0.0
    %94 = vmatpush1.msra.mxu0 0.0
    %95 = vmatprep.subr.mxu0 0.0
    %96 = vmatpush1.msra.mxu0 0.0
    %97 = vmatprep.subr.mxu0 0.0
    %98 = vmatpush1.msra.mxu0 0.0
    %99 = vmatprep.subr.mxu0 0.0
    %100 = vmatpush1.msra.mxu0 0.0
    %101 = vmatprep.subr.mxu0 0.0
    %102 = vmatpush1.msra.mxu0 0.0
    %103 = vmatprep.subr.mxu0 0.0
    %104 = vmatpush1.msra.mxu0 0.0
    %105 = vmatprep.subr.mxu0 0.0
    %106 = vmatpush1.msra.mxu0 0.0
    %107 = vmatprep.subr.mxu0 0.0
    %108 = vmatpush1.msra.mxu0 0.0
    %109 = vmatprep.subr.mxu0 0.0
    %110 = vmatpush1.msra.mxu0 0.0
    %111 = vmatprep.subr.mxu0 0.0
    %112 = vmatpush1.msra.mxu0 0.0
    %113 = vmatprep.subr.mxu0 0.0
    %114 = vmatpush1.msra.mxu0 0.0
    %115 = vmatprep.subr.mxu0 0.0
    %116 = vmatpush1.msra.mxu0 0.0
    %117 = vmatprep.subr.mxu0 0.0
    %118 = vmatpush1.msra.mxu0 0.0
    %119 = vmatprep.subr.mxu0 0.0
    %120 = vmatpush1.msra.mxu0 0.0
    %121 = vmatprep.subr.mxu0 0.0
    %122 = vmatpush1.msra.mxu0 0.0
    %123 = vmatprep.subr.mxu0 0.0
    %124 = vmatpush1.msra.mxu0 0.0
    %125 = vmatprep.subr.mxu0 0.0
    %126 = vmatpush1.msra.mxu0 0.0
    %127 = vmatprep.subr.mxu0 0.0
    %128 = vmatpush1.msra.mxu0 0.0
    %129 = vmatprep.subr.mxu0 0.0
    %130 = vmatpush1.msra.mxu0 0.0
    %131 = vmatprep.subr.mxu0 0.0
    %132 = vmatpush1.msra.mxu0 0.0
    %133 = vmatprep.subr.mxu0 0.0
    %134 = vmatpush1.msra.mxu0 0.0
    %135 = vmatprep.subr.mxu0 0.0
    %136 = vmatpush1.msra.mxu0 0.0
    %137 = vmatprep.subr.mxu0 0.0
    %138 = vmatpush1.msra.mxu0 0.0
    %139 = vmatprep.subr.mxu0 0.0
    %140 = vmatpush1.msra.mxu0 0.0
    %141 = vmatprep.subr.mxu0 0.0
    %142 = vmatpush1.msra.mxu0 0.0
    %143 = vmatprep.subr.mxu0 0.0
    %144 = vmatpush1.msra.mxu0 0.0
    %145 = vmatprep.mubr.f32.mxu0 0.0
    %146 = vmatmul.mubr.f32.gmra.mrb[0].mxu0 %v76
    %v147 = vpop.f32.mrb[0].mxu0
    %v148 = vadd.f32 %v72, %v147
    %v149 = vpop.f32.mrb[0].mxu0
    %150 = vmatprep.mubr.f32.mxu0 0.0
    %151 = vmatmul.mubr.f32.gmra.mrb[0].mxu0 %v79
    %v152 = vpop.f32.mrb[0].mxu0
    %v153 = vadd.f32 %v72, %v152
    %v154 = vpop.f32.mrb[0].mxu0
    %155 = vdwg.mxu0
    %v156 = vsub.f32 0.0, %v148
    %v157 = vsub.f32 0.0, %v153
    %v158 = vmul.f32 %v156, 1.442695
    %v159 = vpow.pop %v158
    %v160 = vmul.f32 %v157, 1.442695
    %v161 = vpow.pop %v160
    %v162 = vadd.f32 %v159, 1.0
    %v163 = vadd.f32 %v161, 1.0
    %v164 = vrcp.pop %v162
    %v165 = vrcp.pop %v163
    %v166 = vsub.f32 %v61, %v59
    %v167 = vsub.f32 %v62, %v60
    %v168 = vmul.f32 %v164, %v166
    %v169 = vmul.f32 %v165, %v167
    %v170 = vadd.f32 %v59, %v168
    %v171 = vadd.f32 %v60, %v169
    %172 = vst.msk [vmem:[#allocation8] sm:$0xff] %vm74, %v170
    %173 = vst.msk [vmem:[#allocation8 + $0x8] sm:$0xff] %vm74, %v171
    // Predicated region
    $region30: #{tpu_custom_call.1} parent=1 // pred_check
      _
    $region31: #{tpu_custom_call.1} parent=1 // pred_check_branch
      %175 = sbr.rel (0) target = $region33
    $region32: #{tpu_custom_call.1} parent=1 // pred_region
      %s177 = ssub.s32 256, 256
      %178 = vsyncadd [#allocation4], %s177
      %s179 = sshll.u32 [#allocation8], 4
      %s180 = int_to_ptr.vmem [resolvable:$true] %s179
      %185 = dma.vmem_to_hbm [thread:$0]  %s180, 256, %s4, [#allocation4], 128, 128, 8
    $region33: #{tpu_custom_call.1} parent=1 // pred_fallthru
      _
    // Predicated region
    $region34: #{tpu_custom_call.1} parent=1 // pred_check
      _
    $region35: #{tpu_custom_call.1} parent=1 // pred_check_branch
      %187 = sbr.rel (0) target = $region37
    $region36: #{tpu_custom_call.1} parent=1 // pred_region
      %188 = dma.done [#allocation4], 256
    $region37: #{tpu_custom_call.1} parent=1 // pred_fallthru
      _
    %189 = vsyncpa [#allocation3], 1
    %190 = vsyncpa [#allocation6], 1
    %191 = vsyncpa [#allocation4], 1

</llo_original>
